<compile_context>
chip_gen: v5e
topology: v5e:2x2
jax: 0.10.0
libtpu: 0.0.40
codegen_flags: <defaults>
</compile_context>

<pallas_src>
import functools

import jax
import jax.numpy as jnp
import numpy as np
from jax import lax
from jax.experimental import pallas as pl
from jax.experimental.pallas import tpu as pltpu


def _round_up(x, m):
    return ((x + m - 1) // m) * m


def _conv1d_nc_kernel(x_hbm, w_ref, b_ref, o_ref, x_halo, x_stk, sem, *,
                      K, c_in, TL, TL_in, dilation):
    """One (batch, L-tile) grid step.

    x_hbm  : (B, c_in, L_in_pad) bf16, HBM (pl.ANY) -- manual halo DMA source
    w_ref  : (C_out, K*c_in)     bf16, VMEM (constant block, single buffer)
    b_ref  : (C_out, 1)          f32,  VMEM (constant block, single buffer)
    o_ref  : (1, C_out, TL)      output block (lane-dense: TL % 128 == 0)
    x_halo : (2, c_in, TL_in)    VMEM halo double-buffer, TL_in >= TL + dil*(K-1)
    x_stk  : (K*c_in, TL)        VMEM stacked MXU operand
    sem    : (2,) DMA semaphores
    """
    b = pl.program_id(0)
    lt = pl.program_id(1)
    slot = lt % 2

    def fetch(tile, dst_slot):
        start = pl.multiple_of(tile * TL, 128)
        pltpu.make_async_copy(
            x_hbm.at[b, :, pl.ds(start, TL_in)],
            x_halo.at[dst_slot], sem.at[dst_slot]).start()

    # Prime the double-buffer on the first L-tile of each batch.
    @pl.when(lt == 0)
    def _():
        fetch(lt, slot)

    # Wait for the current tile's halo window (started just above for lt == 0,
    # or by the previous step's prefetch otherwise).
    pltpu.make_async_copy(
        x_hbm.at[b, :, pl.ds(0, TL_in)], x_halo.at[slot], sem.at[slot]).wait()

    # Prefetch the next L-tile of this batch while the MXU works on this one.
    @pl.when(lt + 1 < pl.num_programs(1))
    def _():
        fetch(lt + 1, 1 - slot)

    # Build the (K*c_in, TL) stacked operand once per tile: row block k holds
    # the halo window shifted by k*dilation (lane shifts happen once, here,
    # instead of once per tap inside the matmul loop).
    for k in range(K):
        off = k * dilation
        x_stk[k * c_in:(k + 1) * c_in, :] = x_halo[slot, :, off:off + TL]

    # Single MXU matmul with contraction K*c_in; accumulation stays in the MXU
    # and the f32 result tile is written exactly once.
    # TODO(synk): on v7x, pltpu.matmul_push_rhs/acc_lhs/pop could accumulate the
    # K taps in the MRB without building the stacked operand at all.
    acc = jnp.dot(w_ref[...], x_stk[...], preferred_element_type=jnp.float32)
    o_ref[0] = (acc + b_ref[...]).astype(o_ref.dtype)


def conv_norm_forward(signal, weight, bias=None, *, stride=1, padding=None,
                      dilation=1, l_tile=1024):
    """ConvNorm forward (PyTorch Conv1d semantics, NCL layout).

    signal: (B, C_in, L) float32
    weight: (C_out, C_in, K)   (PyTorch Conv1d weight layout)
    bias:   (C_out,) or None
    returns (B, C_out, L_out) in signal.dtype
    """
    B, C_in, L = signal.shape
    C_out, C_in_w, K = weight.shape
    assert C_in_w == C_in
    if padding is None:
        assert K % 2 == 1
        padding = dilation * (K - 1) // 2
    if stride != 1:
        # TODO(synk): strided Conv1d is unused by ConvNorm (stride=1 default).
        raise NotImplementedError("stride != 1 not supported")
    if bias is None:
        bias = jnp.zeros((C_out,), jnp.float32)

    halo = dilation * (K - 1)
    L_out = L + 2 * padding - halo
    assert L_out >= 1

    # Output L-tile on the lane axis: multiple of 128, capped by l_tile.
    TL = min(_round_up(l_tile, 128), _round_up(L_out, 128))
    n_lt = pl.cdiv(L_out, TL)
    L_out_pad = n_lt * TL
    # Halo landing buffer / DMA length rounded up to a lane multiple.
    TL_in = _round_up(TL + halo, 128)

    # Pad C_in to the bf16 sublane-packing tile so the stacked-buffer stores
    # are tile-aligned (no-op at real Tacotron channel counts like 512).
    C_in_p = _round_up(C_in, 16)
    KC = K * C_in_p

    # Single wrapper pad (conv 'same' padding + tile round-up + channel pad),
    # fused with the bf16 cast.  No transposes: the kernel consumes/produces
    # NCL directly.
    # TODO(synk): fold the 'same' padding into the kernel (clamped DMA windows
    # + pl.when zero-fill) to skip this extra HBM pass on long sequences, and
    # optionally emit bf16 output if downstream tolerates it.
    L_in_pad = L_out_pad + (TL_in - TL)
    x_pad = jnp.pad(signal.astype(jnp.bfloat16),
                    ((0, 0), (0, C_in_p - C_in),
                     (padding, L_in_pad - L - padding)))

    # Weight flattened to (C_out, K*C_in_p): column k*C_in_p + ci == W[co, ci, k].
    w_pad = jnp.pad(weight, ((0, 0), (0, C_in_p - C_in), (0, 0)))
    w_flat = jnp.transpose(w_pad, (0, 2, 1)).reshape(C_out, KC).astype(jnp.bfloat16)
    b_col = bias.reshape(C_out, 1).astype(jnp.float32)

    kernel = functools.partial(_conv1d_nc_kernel, K=K, c_in=C_in_p, TL=TL,
                               TL_in=TL_in, dilation=dilation)

    # VMEM budget: actual footprint + margin, instead of claiming all of a
    # v7x TensorCore's 64 MiB.
    out_isz = jnp.dtype(signal.dtype).itemsize
    vmem_need = (C_out * KC * 2              # weights, single buffer
                 + C_out * 128 * 4           # bias block (pads to 128 lanes)
                 + 2 * C_out * TL * out_isz  # double-buffered output block
                 + 2 * C_in_p * TL_in * 2    # double-buffered halo scratch
                 + KC * TL * 2)              # stacked MXU operand
    vmem_limit = int(min(2 * vmem_need + (8 << 20), 112 << 20))

    out = pl.pallas_call(
        kernel,
        out_shape=jax.ShapeDtypeStruct((B, C_out, L_out_pad), signal.dtype),
        grid_spec=pltpu.PrefetchScalarGridSpec(
            num_scalar_prefetch=0,
            grid=(B, n_lt),
            in_specs=[
                # Raw HBM ref; the kernel DMAs its (C_in_p, TL_in) halo window.
                pl.BlockSpec(memory_space=pl.ANY),
                # Constant weight/bias blocks: DMA'd once, single-buffered.
                pl.BlockSpec((C_out, KC), lambda b, lt: (0, 0),
                             pipeline_mode=pl.Buffered(1)),
                pl.BlockSpec((C_out, 1), lambda b, lt: (0, 0),
                             pipeline_mode=pl.Buffered(1)),
            ],
            out_specs=pl.BlockSpec((1, C_out, TL), lambda b, lt: (b, 0, lt)),
            scratch_shapes=[
                pltpu.VMEM((2, C_in_p, TL_in), jnp.bfloat16),  # halo double-buffer
                pltpu.VMEM((KC, TL), jnp.bfloat16),            # stacked operand
                pltpu.SemaphoreType.DMA((2,)),
            ],
        ),
        compiler_params=pltpu.CompilerParams(
            # lt is "arbitrary": the cross-step halo prefetch needs a
            # deterministic traversal.  B stays "parallel" for megacore.
            # TODO(synk): at B=1 on v7x, switch to in-kernel sub-tile double
            # buffering so lt can stay "parallel" across the 2 TensorCores.
            dimension_semantics=("parallel", "arbitrary"),
            vmem_limit_bytes=vmem_limit),
    )(x_pad, w_flat, b_col)

    if L_out_pad != L_out:
        out = out[:, :, :L_out]
    return out


def init_conv_norm_params(key, in_channels, out_channels, kernel_size,
                          w_init_gain="linear"):
    """Xavier-uniform weight (torch gain) + PyTorch-default uniform bias."""
    gain = {"linear": 1.0, "relu": float(np.sqrt(2.0)), "tanh": 5.0 / 3.0}[w_init_gain]
    fan_in = in_channels * kernel_size
    fan_out = out_channels * kernel_size
    w_bound = gain * np.sqrt(6.0 / (fan_in + fan_out))
    k_w, k_b = jax.random.split(key)
    weight = jax.random.uniform(
        k_w, (out_channels, in_channels, kernel_size),
        minval=-w_bound, maxval=w_bound, dtype=jnp.float32)
    b_bound = 1.0 / np.sqrt(fan_in)
    bias = jax.random.uniform(
        k_b, (out_channels,), minval=-b_bound, maxval=b_bound, dtype=jnp.float32)
    return weight, bias


if __name__ == "__main__":
    key = jax.random.PRNGKey(0)
    k_x, k_p = jax.random.split(key)

    # Small shapes consistent with ConvNorm: batch=2, in_channels=4,
    # out_channels=8, sequence length=16, kernel_size=5 (odd, 'same' padding).
    B, C_in, C_out, L, K = 2, 4, 8, 16, 5
    x = jax.random.normal(k_x, (B, C_in, L), dtype=jnp.float32)
    weight, bias = init_conv_norm_params(k_p, C_in, C_out, K, w_init_gain="linear")

    out = conv_norm_forward(x, weight, bias)
    out = jax.block_until_ready(out)
    assert out.shape == (B, C_out, L)

    pad = (K - 1) // 2
    # Reference with the same math as the kernel (bf16 operands, f32 accumulate).
    ref_bf16 = lax.conv_general_dilated(
        x.astype(jnp.bfloat16), weight.astype(jnp.bfloat16),
        window_strides=(1,), padding=[(pad, pad)],
        dimension_numbers=("NCH", "OIH", "NCH"),
        preferred_element_type=jnp.float32) + bias[None, :, None]
    np.testing.assert_allclose(np.asarray(out), np.asarray(ref_bf16),
                               rtol=1e-4, atol=1e-4)

    # Loose sanity check against the full-f32 conv (kernel uses bf16 MXU operands).
    ref_f32 = lax.conv_general_dilated(
        x, weight, window_strides=(1,), padding=[(pad, pad)],
        dimension_numbers=("NCH", "OIH", "NCH")) + bias[None, :, None]
    np.testing.assert_allclose(np.asarray(out), np.asarray(ref_f32),
                               rtol=5e-2, atol=5e-2)

    print("KERNEL_OK")
</pallas_src>

<mosaic_0001>
module attributes {stable_mosaic.version = 11 : i64} {
  func.func @_conv1d_nc_kernel(%arg0: i32, %arg1: i32, %arg2: memref<2x16x256xbf16, #tpu.memory_space<any>>, %arg3: memref<8x80xbf16, #tpu.memory_space<vmem>>, %arg4: memref<8x1xf32, #tpu.memory_space<vmem>>, %arg5: memref<1x8x128xf32, #tpu.memory_space<vmem>>, %arg6: memref<2x16x256xbf16, #tpu.memory_space<vmem>>, %arg7: memref<80x128xbf16, #tpu.memory_space<vmem>>, %arg8: memref<2x!tpu.dma_semaphore, #tpu.memory_space<semaphore_mem>>) attributes {dimension_semantics = [#tpu.dimension_semantics<parallel>, #tpu.dimension_semantics<arbitrary>], iteration_bounds = array<i64: 2, 1>, scalar_prefetch = 0 : i64, scratch_operands = 3 : i64, tpu.core_type = #tpu.core_type<tc>, window_params = [{}, {pipeline_mode = #tpu.pipeline_mode<synchronous>, transform_indices = @transform_1, window_bounds = array<i64: 8, 80>}, {pipeline_mode = #tpu.pipeline_mode<synchronous>, transform_indices = @transform_2, window_bounds = array<i64: 8, 1>}, {transform_indices = @transform_3, window_bounds = array<i64: 1, 8, 128>}]} {
    %c2_i32 = arith.constant 2 : i32
    %c0_i32 = arith.constant 0 : i32
    %0 = arith.cmpi eq, %c2_i32, %c0_i32 : i32
    %c1_i32 = arith.constant 1 : i32
    %1 = arith.select %0, %c1_i32, %c2_i32 : i32
    %2 = arith.remsi %arg1, %1 : i32
    %c0_i32_0 = arith.constant 0 : i32
    %3 = arith.cmpi ne, %2, %c0_i32_0 : i32
    %c0_i32_1 = arith.constant 0 : i32
    %4 = arith.cmpi slt, %2, %c0_i32_1 : i32
    %c0_i32_2 = arith.constant 0 : i32
    %5 = arith.cmpi slt, %1, %c0_i32_2 : i32
    %6 = arith.xori %4, %5 : i1
    %7 = arith.andi %6, %3 : i1
    %8 = arith.addi %2, %1 : i32
    %9 = arith.select %7, %8, %2 : i32
    %c0_i32_3 = arith.constant 0 : i32
    %10 = arith.cmpi eq, %arg1, %c0_i32_3 : i32
    %11 = arith.extui %10 : i1 to i32
    %c0_i32_4 = arith.constant 0 : i32
    %12 = arith.cmpi ne, %11, %c0_i32_4 : i32
    scf.if %12 {
      %c128_i32 = arith.constant 128 : i32
      %52 = arith.muli %arg1, %c128_i32 : i32
      %53 = tpu.assume_multiple %52, 128 : i32
      %c0_i32_32 = arith.constant 0 : i32
      %54 = tpu.memref_slice %arg2[%arg0, %c0_i32_32, %53] : memref<2x16x256xbf16, #tpu.memory_space<any>> -> memref<1x16x256xbf16, #tpu.memory_space<any>>
      %55 = tpu.memref_squeeze %54 : memref<1x16x256xbf16, #tpu.memory_space<any>> -> memref<16x256xbf16, #tpu.memory_space<any>>
      %c0_i32_33 = arith.constant 0 : i32
      %c0_i32_34 = arith.constant 0 : i32
      %56 = tpu.memref_slice %arg6[%9, %c0_i32_33, %c0_i32_34] : memref<2x16x256xbf16, #tpu.memory_space<vmem>> -> memref<1x16x256xbf16, #tpu.memory_space<vmem>>
      %57 = tpu.memref_squeeze %56 : memref<1x16x256xbf16, #tpu.memory_space<vmem>> -> memref<16x256xbf16, #tpu.memory_space<vmem>>
      %58 = tpu.memref_slice %arg8[%9] : memref<2x!tpu.dma_semaphore, #tpu.memory_space<semaphore_mem>> -> memref<1x!tpu.dma_semaphore, #tpu.memory_space<semaphore_mem>>
      %59 = tpu.memref_squeeze %58 : memref<1x!tpu.dma_semaphore, #tpu.memory_space<semaphore_mem>> -> memref<!tpu.dma_semaphore, #tpu.memory_space<semaphore_mem>>
      tpu.enqueue_dma source(%55 : memref<16x256xbf16, #tpu.memory_space<any>>) target(%57 : memref<16x256xbf16, #tpu.memory_space<vmem>>) target_semaphore(%59 : memref<!tpu.dma_semaphore, #tpu.memory_space<semaphore_mem>>)
    } else {
    }
    %c0_i32_5 = arith.constant 0 : i32
    %c0_i32_6 = arith.constant 0 : i32
    %13 = tpu.memref_slice %arg2[%arg0, %c0_i32_5, %c0_i32_6] : memref<2x16x256xbf16, #tpu.memory_space<any>> -> memref<1x16x256xbf16, #tpu.memory_space<any>>
    %14 = tpu.memref_squeeze %13 : memref<1x16x256xbf16, #tpu.memory_space<any>> -> memref<16x256xbf16, #tpu.memory_space<any>>
    %c0_i32_7 = arith.constant 0 : i32
    %c0_i32_8 = arith.constant 0 : i32
    %15 = tpu.memref_slice %arg6[%9, %c0_i32_7, %c0_i32_8] : memref<2x16x256xbf16, #tpu.memory_space<vmem>> -> memref<1x16x256xbf16, #tpu.memory_space<vmem>>
    %16 = tpu.memref_squeeze %15 : memref<1x16x256xbf16, #tpu.memory_space<vmem>> -> memref<16x256xbf16, #tpu.memory_space<vmem>>
    %17 = tpu.memref_slice %arg8[%9] : memref<2x!tpu.dma_semaphore, #tpu.memory_space<semaphore_mem>> -> memref<1x!tpu.dma_semaphore, #tpu.memory_space<semaphore_mem>>
    %18 = tpu.memref_squeeze %17 : memref<1x!tpu.dma_semaphore, #tpu.memory_space<semaphore_mem>> -> memref<!tpu.dma_semaphore, #tpu.memory_space<semaphore_mem>>
    tpu.wait_dma2 semaphore(%18 : memref<!tpu.dma_semaphore, #tpu.memory_space<semaphore_mem>>) src(%14 : memref<16x256xbf16, #tpu.memory_space<any>>) dst(%16 : memref<16x256xbf16, #tpu.memory_space<vmem>>)
    %c1_i32_9 = arith.constant 1 : i32
    %19 = arith.addi %arg1, %c1_i32_9 : i32
    %c1_i32_10 = arith.constant 1 : i32
    %20 = arith.cmpi slt, %19, %c1_i32_10 : i32
    %21 = arith.extui %20 : i1 to i32
    %c0_i32_11 = arith.constant 0 : i32
    %22 = arith.cmpi ne, %21, %c0_i32_11 : i32
    scf.if %22 {
      %c1_i32_32 = arith.constant 1 : i32
      %52 = arith.addi %arg1, %c1_i32_32 : i32
      %c1_i32_33 = arith.constant 1 : i32
      %53 = arith.subi %c1_i32_33, %9 : i32
      %c128_i32 = arith.constant 128 : i32
      %54 = arith.muli %52, %c128_i32 : i32
      %55 = tpu.assume_multiple %54, 128 : i32
      %c0_i32_34 = arith.constant 0 : i32
      %56 = tpu.memref_slice %arg2[%arg0, %c0_i32_34, %55] : memref<2x16x256xbf16, #tpu.memory_space<any>> -> memref<1x16x256xbf16, #tpu.memory_space<any>>
      %57 = tpu.memref_squeeze %56 : memref<1x16x256xbf16, #tpu.memory_space<any>> -> memref<16x256xbf16, #tpu.memory_space<any>>
      %c0_i32_35 = arith.constant 0 : i32
      %c0_i32_36 = arith.constant 0 : i32
      %58 = tpu.memref_slice %arg6[%53, %c0_i32_35, %c0_i32_36] : memref<2x16x256xbf16, #tpu.memory_space<vmem>> -> memref<1x16x256xbf16, #tpu.memory_space<vmem>>
      %59 = tpu.memref_squeeze %58 : memref<1x16x256xbf16, #tpu.memory_space<vmem>> -> memref<16x256xbf16, #tpu.memory_space<vmem>>
      %60 = tpu.memref_slice %arg8[%53] : memref<2x!tpu.dma_semaphore, #tpu.memory_space<semaphore_mem>> -> memref<1x!tpu.dma_semaphore, #tpu.memory_space<semaphore_mem>>
      %61 = tpu.memref_squeeze %60 : memref<1x!tpu.dma_semaphore, #tpu.memory_space<semaphore_mem>> -> memref<!tpu.dma_semaphore, #tpu.memory_space<semaphore_mem>>
      tpu.enqueue_dma source(%57 : memref<16x256xbf16, #tpu.memory_space<any>>) target(%59 : memref<16x256xbf16, #tpu.memory_space<vmem>>) target_semaphore(%61 : memref<!tpu.dma_semaphore, #tpu.memory_space<semaphore_mem>>)
    } else {
    }
    %23 = arith.index_cast %9 : i32 to index
    %c0 = arith.constant 0 : index
    %c0_12 = arith.constant 0 : index
    %24 = vector.load %arg6[%23, %c0, %c0_12] : memref<2x16x256xbf16, #tpu.memory_space<vmem>>, vector<1x16x128xbf16>
    %25 = vector.shape_cast %24 : vector<1x16x128xbf16> to vector<16x128xbf16>
    %c0_13 = arith.constant 0 : index
    %c0_14 = arith.constant 0 : index
    %26 = vector.load %arg7[%c0_13, %c0_14] : memref<80x128xbf16, #tpu.memory_space<vmem>>, vector<16x128xbf16>
    tpu.vector_store %arg7[%c0_13, %c0_14], %25 {strides = array<i32>} : memref<80x128xbf16, #tpu.memory_space<vmem>>, vector<16x128xbf16>,
    %27 = arith.index_cast %9 : i32 to index
    %c0_15 = arith.constant 0 : index
    %c1 = arith.constant 1 : index
    %28 = vector.load %arg6[%27, %c0_15, %c1] : memref<2x16x256xbf16, #tpu.memory_space<vmem>>, vector<1x16x128xbf16>
    %29 = vector.shape_cast %28 : vector<1x16x128xbf16> to vector<16x128xbf16>
    %c16 = arith.constant 16 : index
    %c0_16 = arith.constant 0 : index
    %30 = vector.load %arg7[%c16, %c0_16] : memref<80x128xbf16, #tpu.memory_space<vmem>>, vector<16x128xbf16>
    tpu.vector_store %arg7[%c16, %c0_16], %29 {strides = array<i32>} : memref<80x128xbf16, #tpu.memory_space<vmem>>, vector<16x128xbf16>,
    %31 = arith.index_cast %9 : i32 to index
    %c0_17 = arith.constant 0 : index
    %c2 = arith.constant 2 : index
    %32 = vector.load %arg6[%31, %c0_17, %c2] : memref<2x16x256xbf16, #tpu.memory_space<vmem>>, vector<1x16x128xbf16>
    %33 = vector.shape_cast %32 : vector<1x16x128xbf16> to vector<16x128xbf16>
    %c32 = arith.constant 32 : index
    %c0_18 = arith.constant 0 : index
    %34 = vector.load %arg7[%c32, %c0_18] : memref<80x128xbf16, #tpu.memory_space<vmem>>, vector<16x128xbf16>
    tpu.vector_store %arg7[%c32, %c0_18], %33 {strides = array<i32>} : memref<80x128xbf16, #tpu.memory_space<vmem>>, vector<16x128xbf16>,
    %35 = arith.index_cast %9 : i32 to index
    %c0_19 = arith.constant 0 : index
    %c3 = arith.constant 3 : index
    %36 = vector.load %arg6[%35, %c0_19, %c3] : memref<2x16x256xbf16, #tpu.memory_space<vmem>>, vector<1x16x128xbf16>
    %37 = vector.shape_cast %36 : vector<1x16x128xbf16> to vector<16x128xbf16>
    %c48 = arith.constant 48 : index
    %c0_20 = arith.constant 0 : index
    %38 = vector.load %arg7[%c48, %c0_20] : memref<80x128xbf16, #tpu.memory_space<vmem>>, vector<16x128xbf16>
    tpu.vector_store %arg7[%c48, %c0_20], %37 {strides = array<i32>} : memref<80x128xbf16, #tpu.memory_space<vmem>>, vector<16x128xbf16>,
    %39 = arith.index_cast %9 : i32 to index
    %c0_21 = arith.constant 0 : index
    %c4 = arith.constant 4 : index
    %40 = vector.load %arg6[%39, %c0_21, %c4] : memref<2x16x256xbf16, #tpu.memory_space<vmem>>, vector<1x16x128xbf16>
    %41 = vector.shape_cast %40 : vector<1x16x128xbf16> to vector<16x128xbf16>
    %c64 = arith.constant 64 : index
    %c0_22 = arith.constant 0 : index
    %42 = vector.load %arg7[%c64, %c0_22] : memref<80x128xbf16, #tpu.memory_space<vmem>>, vector<16x128xbf16>
    tpu.vector_store %arg7[%c64, %c0_22], %41 {strides = array<i32>} : memref<80x128xbf16, #tpu.memory_space<vmem>>, vector<16x128xbf16>,
    %c0_23 = arith.constant 0 : index
    %c0_24 = arith.constant 0 : index
    %43 = vector.load %arg3[%c0_23, %c0_24] : memref<8x80xbf16, #tpu.memory_space<vmem>>, vector<8x80xbf16>
    %c0_25 = arith.constant 0 : index
    %c0_26 = arith.constant 0 : index
    %44 = vector.load %arg7[%c0_25, %c0_26] : memref<80x128xbf16, #tpu.memory_space<vmem>>, vector<80x128xbf16>
    %cst = arith.constant dense<0.000000e+00> : vector<8x128xf32>
    %45 = tpu.matmul %43, %44, %cst {dimension_numbers = #tpu.dot_dimension_numbers<[1], [0], [0], [1], [0, 0, 1, 1], [], []>} : vector<8x80xbf16>, vector<80x128xbf16>, vector<8x128xf32> -> vector<8x128xf32>
    %c0_27 = arith.constant 0 : index
    %c0_28 = arith.constant 0 : index
    %46 = vector.load %arg4[%c0_27, %c0_28] : memref<8x1xf32, #tpu.memory_space<vmem>>, vector<8x1xf32>
    %47 = vector.broadcast %46 : vector<8x1xf32> to vector<8x128xf32>
    %48 = arith.addf %45, %47 : vector<8x128xf32>
    %c0_29 = arith.constant 0 : index
    %c0_30 = arith.constant 0 : index
    %c0_31 = arith.constant 0 : index
    %49 = vector.load %arg5[%c0_29, %c0_30, %c0_31] : memref<1x8x128xf32, #tpu.memory_space<vmem>>, vector<1x8x128xf32>
    %50 = vector.shape_cast %49 : vector<1x8x128xf32> to vector<8x128xf32>
    %51 = vector.shape_cast %48 : vector<8x128xf32> to vector<1x8x128xf32>
    tpu.vector_store %arg5[%c0_29, %c0_30, %c0_31], %51 {strides = array<i32>} : memref<1x8x128xf32, #tpu.memory_space<vmem>>, vector<1x8x128xf32>,
    return
  }
  func.func @transform_1(%arg0: i32, %arg1: i32) -> (i32, i32) {
    %c0_i32 = arith.constant 0 : i32
    %c0_i32_0 = arith.constant 0 : i32
    %c0_i32_1 = arith.constant 0 : i32
    return %c0_i32, %c0_i32_0 : i32, i32
  }
  func.func @transform_2(%arg0: i32, %arg1: i32) -> (i32, i32) {
    %c0_i32 = arith.constant 0 : i32
    %c0_i32_0 = arith.constant 0 : i32
    %c0_i32_1 = arith.constant 0 : i32
    return %c0_i32, %c0_i32_0 : i32, i32
  }
  func.func @transform_3(%arg0: i32, %arg1: i32) -> (i32, i32, i32) {
    %c0_i32 = arith.constant 0 : i32
    %c0_i32_0 = arith.constant 0 : i32
    return %arg0, %c0_i32, %arg1 : i32, i32, i32
  }
}

</mosaic_0001>

<llo_original>
// kernel: tpu_custom_call.1
$region0: #{tpu_custom_call.1}
  #allocation0 [shape = 'u32[]', space=smem, size = 0x4, offset = 0x4, fixed_abs, tag = 'smem constant byte address 0x4 - core index']
  #allocation1 [shape = 'u32[72,128]{1,0:T(1,128)}', space=vmem, size = 0x9000, scoped, tag = 'internal scratch']
  #allocation2 [shape = 'bf16[2,16,256]{2,1,0:T(8,128)(2,1)}', space=vmem, size = 0x4000, scoped, tag = 'scratch operand']
  #allocation3 [shape = 'bf16[80,128]{1,0:T(8,128)(2,1)}', space=vmem, size = 0x5000, scoped, tag = 'scratch operand']
  #allocation4 [shape = 's32[2]{0}', space=sflag, size = 0x8, scoped, tag = 'scratch operand']
  #allocation7 [shape = 's32[]', space=sflag, size = 0x4, offset = 0, fixed_abs, tag = 'sflag constant byte address 0x0 - dummy sync flag']
  #allocation8 [shape = 's32[]', space=sflag, size = 0x4, offset = 0, fixed_abs, tag = 'sflag constant byte address 0x0 - dummy sync flag']
  #allocation9 [shape = 'u32[]', space=smem, size = 0x4, offset = 0x44, fixed_abs, tag = 'smem constant byte address 0x44 - assertion arg 0']
  #allocation10 [shape = 'u32[]', space=smem, size = 0x4, offset = 0x48, fixed_abs, tag = 'smem constant byte address 0x48 - assertion arg 1']
  #allocation11 [shape = 's32[]', space=sflag, size = 0x4, offset = 0, fixed_abs, tag = 'sflag constant byte address 0x0 - dummy sync flag']
  #allocation12 [shape = 's32[]', space=sflag, size = 0x4, offset = 0, fixed_abs, tag = 'sflag constant byte address 0x0 - dummy sync flag']
  %s0 = inlined_call_operand.hbm [shape: bf16[2,16,256], index: 0, kind: input, shape index: {}]
  %s1 = inlined_call_operand.vmem [shape: bf16[8,80], index: 1, kind: input, shape index: {}]
  %s2 = inlined_call_operand.vmem [shape: f32[8,1], index: 2, kind: input, shape index: {}]
  %s3 = inlined_call_operand.hbm [shape: f32[2,8,128], index: 3, kind: output, shape index: {}]
  %s4 = sld [smem:[#allocation0]]
  $region57: #{tpu_custom_call.1} parent=0
    _
  %s6 = ssub.s32 1, %s4
  %s7 = scalar_select 0, %s6, %s4
  $region1: #{tpu_custom_call.1} parent=0
    #allocation5 [shape = 'u8[8192]{0}', space=vmem, size = 0x2000, scoped, tag = 'output window, operand 0']
    #allocation6 [shape = 's32[2]{0}', space=sflag, size = 0x8, scoped, tag = 'scoped memory for tpu_custom_call.1']
    %8 = vsyncpa [#allocation6], 0
    %s9 = scalar_lea.sflag [#allocation6], 1
    %10 = vsyncpa %s9, 0
    loop: start=0, step=1, limit=4
    $region2: #{tpu_custom_call.1} parent=1 // loop_pre_header
      _
    $region3: #{tpu_custom_call.1} parent=1 // loop_header
      %s12 = sphi 0, %s16
      %p13 = scmp.ge.s32.totalorder %s12, 4
      %s19 = sphi 0, %s31
      %s20 = sphi 0, %s27
      %s21 = sphi 0, %s19
      %s22 = sphi 0, %s20
      %s23 = sphi 0, %s21
      %s24 = sphi 0, %s22
      %s32 = sphi 0, %s32
      %s34 = sphi 0, %s32
      %s35 = sphi 0, %s34
      %s49 = sphi 0, %s35
      %s53 = sphi 0, %s53
      %s55 = sphi 0, %s53
      %s56 = sphi 0, %s55
      %s70 = sphi 0, %s56
      %s78 = sphi 0, %s80
      %s81 = sphi 0, %s78
      %s82 = sphi 0, %s81
      %s98 = sphi 0, %s82
    $region4: #{tpu_custom_call.1} parent=1 // loop_header_branch
      %15 = sbr.rel (%p13) target = $region8
    $region5: #{tpu_custom_call.1} parent=1 // loop_body
      %s17 = ssub.s32 %s12, 1
      %s18 = ssub.s32 %s12, 2
      %s25 = sadd.s32 1, %s20
      %p26 = scmp.ge.s32.totalorder %s25, 1
      %s27 = scalar_select %p26, 0, %s25
      %s28 = sadd.s32 1, %s19
      %s29 = scalar_select %p26, %s28, %s19
      %p30 = scmp.ge.s32.totalorder %s29, 2
      %s31 = scalar_select %p30, 0, %s29
      %s33 = sadd.s32 %s32, 1
      %p36 = scmp.eq.s32.totalorder %s12, 1
      %p37 = scmp.ne.s32.totalorder %s32, %s34
      %p38 = scmp.eq.s32.totalorder %s12, 0
      %p39 = por %p37, %p38
      %p40 = scmp.ne.s32.totalorder %s32, %s34
      %p41 = scmp.eq.s32.totalorder %s17, 1
      %p42 = por %p40, %p41
      %p43 = scmp.ne.s32.totalorder %s34, %s35
      %p44 = scmp.eq.s32.totalorder %s17, 0
      %p45 = por %p43, %p44
      %p46 = scmp.ne.s32.totalorder %s34, %s35
      %p47 = scmp.eq.s32.totalorder %s18, 1
      %p48 = por %p46, %p47
      %p50 = scmp.ne.s32.totalorder %s35, %s49
      %p51 = scmp.eq.s32.totalorder %s18, 0
      %p52 = por %p50, %p51
      %s54 = sadd.s32 %s53, 1
      %p57 = scmp.eq.s32.totalorder %s12, 1
      %p58 = scmp.ne.s32.totalorder %s53, %s55
      %p59 = scmp.eq.s32.totalorder %s12, 0
      %p60 = por %p58, %p59
      %p61 = scmp.ne.s32.totalorder %s53, %s55
      %p62 = scmp.eq.s32.totalorder %s17, 1
      %p63 = por %p61, %p62
      %p64 = scmp.ne.s32.totalorder %s55, %s56
      %p65 = scmp.eq.s32.totalorder %s17, 0
      %p66 = por %p64, %p65
      %p67 = scmp.ne.s32.totalorder %s55, %s56
      %p68 = scmp.eq.s32.totalorder %s18, 1
      %p69 = por %p67, %p68
      %p71 = scmp.ne.s32.totalorder %s56, %s70
      %p72 = scmp.eq.s32.totalorder %s18, 0
      %p73 = por %p71, %p72
      %s74 = ssub.s32 %s19, %s31
      %s75 = ssub.s32 %s20, %s27
      %s76 = sor.u32 %s74, %s75
      %p77 = scmp.eq.s32.totalorder %s76, 0
      %s79 = sadd.s32 %s78, 1
      %s80 = scalar_select %p77, %s78, %s79
      %p83 = pneg %p77
      %p84 = scmp.eq.s32.totalorder %s12, 1
      %p85 = por %p83, %p84
      %p86 = scmp.ne.s32.totalorder %s78, %s81
      %p87 = scmp.eq.s32.totalorder %s12, 0
      %p88 = por %p86, %p87
      %p89 = scmp.ne.s32.totalorder %s78, %s81
      %p90 = scmp.eq.s32.totalorder %s17, 1
      %p91 = por %p89, %p90
      %p92 = scmp.ne.s32.totalorder %s81, %s82
      %p93 = scmp.eq.s32.totalorder %s17, 0
      %p94 = por %p92, %p93
      %p95 = scmp.ne.s32.totalorder %s81, %s82
      %p96 = scmp.eq.s32.totalorder %s18, 1
      %p97 = por %p95, %p96
      %p99 = scmp.ne.s32.totalorder %s82, %s98
      %p100 = scmp.eq.s32.totalorder %s18, 0
      %p101 = por %p99, %p100
      %p102 = scmp.le.s32.totalorder 1, %s12
      %p103 = scmp.lt.s32.totalorder %s12, 3
      %p104 = pnand %p102, %p103
      %p105 = pneg %p104
      // Predicated region
      $region9: #{tpu_custom_call.1} parent=5 // pred_check
        _
      $region10: #{tpu_custom_call.1} parent=5 // pred_check_branch
        %107 = sbr.rel (%p104) target = $region12
      $region11: #{tpu_custom_call.1} parent=5 // pred_region
        %s108 = ssub.s32 %s12, 1
        // Predicated region
        $region13: #{tpu_custom_call.1} parent=11 // pred_check
          %p109 = pneg %p45
        $region14: #{tpu_custom_call.1} parent=11 // pred_check_branch
          %111 = sbr.rel (%p109) target = $region16
        $region15: #{tpu_custom_call.1} parent=11 // pred_region
          _
        $region16: #{tpu_custom_call.1} parent=11 // pred_fallthru
          _
        // Predicated region
        $region17: #{tpu_custom_call.1} parent=11 // pred_check
          %p112 = pneg %p66
        $region18: #{tpu_custom_call.1} parent=11 // pred_check_branch
          %114 = sbr.rel (%p112) target = $region20
        $region19: #{tpu_custom_call.1} parent=11 // pred_region
          _
        $region20: #{tpu_custom_call.1} parent=11 // pred_fallthru
          _
      $region12: #{tpu_custom_call.1} parent=5 // pred_fallthru
        _
      %p115 = scmp.lt.s32.totalorder %s12, 2
      // Predicated region
      $region21: #{tpu_custom_call.1} parent=5 // pred_check
        %p116 = pneg %p115
      $region22: #{tpu_custom_call.1} parent=5 // pred_check_branch
        %118 = sbr.rel (%p116) target = $region24
      $region23: #{tpu_custom_call.1} parent=5 // pred_region
        _
      $region24: #{tpu_custom_call.1} parent=5 // pred_fallthru
        _
      %p119 = scmp.le.s32.totalorder 1, %s12
      %p120 = scmp.lt.s32.totalorder %s12, 3
      %p121 = pnand %p119, %p120
      %p122 = pneg %p121
      // Predicated region
      $region25: #{tpu_custom_call.1} parent=5 // pred_check
        _
      $region26: #{tpu_custom_call.1} parent=5 // pred_check_branch
        %124 = sbr.rel (%p121) target = $region28
      $region27: #{tpu_custom_call.1} parent=5 // pred_region
        %s125 = ssub.s32 %s12, 1
        %p126 = pneg %p45
        %p127 = pneg %p42
        %p128 = pneg %p66
        %p129 = pneg %p63
        %p130 = pneg %p94
        %p131 = pneg %p91
        %s132 = sand.u32 %s81, 1
        %s133 = scalar_lea.sflag [#allocation6], %s132
        %s134 = sand.u32 %s81, 1
        %s135 = smul.addr %s134, 8
        %s136 = scalar_lea.vmem [#allocation5], %s135
        %p138 = scmp.lt.s32.totalorder %s22, 0
        %s139 = ssub.s32 0, %s22
        %s140 = scalar_select %p138, %s139, %s22
        %s141 = sand.u32 %s140, 1
        %s142 = ssub.s32 0, %s141
        %s143 = scalar_select %p138, %s142, %s141
        %p144 = scmp.ne.s32.totalorder %s143, 0
        %p145 = scmp.lt.s32.totalorder %s143, 0
        %p146 = pnand %p145, %p144
        %p147 = pneg %p146
        %s148 = sadd.s32 %s143, 2
        %s149 = scalar_select %p147, %s148, %s143
        %p150 = scmp.eq.s32.totalorder %s22, 0
        // Predicated region
        $region29: #{tpu_custom_call.1} parent=27 // pred_check
          %p151 = pneg %p150
        $region30: #{tpu_custom_call.1} parent=27 // pred_check_branch
          %153 = sbr.rel (%p151) target = $region32
        $region31: #{tpu_custom_call.1} parent=27 // pred_region
          %s154 = smul.u32 %s22, 128
          %s155 = sshra.s32 %s154, 7
          %s156 = sand.u32 %s154, 127
          %s157 = smul.u32 %s21, 4
          %s158 = sadd.s32 %s155, %s157
          %s159 = smul.addr %s158, 4
          %s160 = scalar_lea.hbm %s0, %s159
          %s161 = smul.u32 %s149, 4
          %s162 = smul.addr %s161, 4
          %s163 = scalar_lea.vmem [#allocation2], %s162
          %s164 = scalar_lea.sflag [#allocation4], %s149
          // Predicated region
          $region33: #{tpu_custom_call.1} parent=31 // pred_check
            _
          $region34: #{tpu_custom_call.1} parent=31 // pred_check_branch
            %166 = sbr.rel target = $region36
          $region35: #{tpu_custom_call.1} parent=31 // pred_region
            %167 = sst [smem:[#allocation9]] [#allocation8]
            %168 = sst [smem:[#allocation10]] [#allocation7]
          $region36: #{tpu_custom_call.1} parent=31 // pred_fallthru
            _
          %170 = shalt.err (0)
          %s172 = sshll.u32 %s160, 4
          %s173 = int_to_ptr.hbm [resolvable:$true] %s172
          %s174 = sshll.u32 %s163, 4
          %s175 = int_to_ptr.vmem [resolvable:$true] %s174
          %177 = dma.hbm_to_vmem [thread:$0]  %s173, 256, %s175, %s164
        $region32: #{tpu_custom_call.1} parent=27 // pred_fallthru
          _
        %s178 = smul.u32 %s149, 4
        %s179 = smul.addr %s178, 4
        %s180 = scalar_lea.vmem [#allocation2], %s179
        %s181 = scalar_lea.sflag [#allocation4], %s149
        %s182 = smul.u32 4, 2
        %s183 = smul.u32 %s182, 2
        %s184 = sshll.u32 %s183, 4
        %185 = dma.done %s181, %s184
        %s186 = sadd.s32 %s22, 1
        %p187 = scmp.lt.s32.totalorder %s186, 1
        // Predicated region
        $region37: #{tpu_custom_call.1} parent=27 // pred_check
          %p188 = pneg %p187
        $region38: #{tpu_custom_call.1} parent=27 // pred_check_branch
          %190 = sbr.rel (%p188) target = $region40
        $region39: #{tpu_custom_call.1} parent=27 // pred_region
          %s191 = ssub.s32 1, %s149
          %s192 = smul.u32 %s186, 128
          %s193 = sshra.s32 %s192, 7
          %s194 = sand.u32 %s192, 127
          %s195 = smul.u32 %s21, 4
          %s196 = sadd.s32 %s193, %s195
          %s197 = smul.addr %s196, 4
          %s198 = scalar_lea.hbm %s0, %s197
          %s199 = smul.u32 %s191, 4
          %s200 = smul.addr %s199, 4
          %s201 = scalar_lea.vmem [#allocation2], %s200
          %s202 = scalar_lea.sflag [#allocation4], %s191
          // Predicated region
          $region41: #{tpu_custom_call.1} parent=39 // pred_check
            _
          $region42: #{tpu_custom_call.1} parent=39 // pred_check_branch
            %204 = sbr.rel target = $region44
          $region43: #{tpu_custom_call.1} parent=39 // pred_region
            %205 = sst [smem:[#allocation9]] [#allocation12]
            %206 = sst [smem:[#allocation10]] [#allocation11]
          $region44: #{tpu_custom_call.1} parent=39 // pred_fallthru
            _
          %208 = shalt.err (0)
          %s210 = sshll.u32 %s198, 4
          %s211 = int_to_ptr.hbm [resolvable:$true] %s210
          %s212 = sshll.u32 %s201, 4
          %s213 = int_to_ptr.vmem [resolvable:$true] %s212
          %215 = dma.hbm_to_vmem [thread:$0]  %s211, 256, %s213, %s202
        $region40: #{tpu_custom_call.1} parent=27 // pred_fallthru
          _
        %v216 = vld [vmem:[%s180] sm:$0xf]
        %v217 = vld [vmem:[%s180 + $0x8] sm:$0xf]
        %218 = vst [vmem:[#allocation3] sm:$0xf] %v216
        %219 = vst [vmem:[#allocation3 + $0x4] sm:$0xf] %v217
        %v220 = vld [vmem:[%s180] sm:$0xff]
        %v221 = vld [vmem:[%s180 + $0x8] sm:$0xff]
        %224 = vrot.lane.b32.xlu0 %v220, 127
        %v225 = vpop.permute.xlu0 %224
        %226 = vrot.lane.b32.xlu0 %v221, 127
        %v227 = vpop.permute.xlu0 %226
        %v228 = vrot.slane %v225, 4
        %v229 = vrot.slane %v227, 4
        %vm230 = vcmask 1039360
        %v231 = vsel %vm230, %v225, %v228
        %v232 = vsel %vm230, %v227, %v229
        %235 = vst [vmem:[#allocation3 + $0x8] sm:$0xf] %v231
        %236 = vst [vmem:[#allocation3 + $0xc] sm:$0xf] %v232
        %v237 = vld [vmem:[%s180] sm:$0xff]
        %v238 = vld [vmem:[%s180 + $0x8] sm:$0xff]
        %241 = vrot.lane.b32.xlu0 %v237, 126
        %v242 = vpop.permute.xlu0 %241
        %243 = vrot.lane.b32.xlu0 %v238, 126
        %v244 = vpop.permute.xlu0 %243
        %v245 = vrot.slane %v242, 4
        %v246 = vrot.slane %v244, 4
        %vm247 = vcmask 1031168
        %v248 = vsel %vm247, %v242, %v245
        %v249 = vsel %vm247, %v244, %v246
        %252 = vst [vmem:[#allocation3 + $0x10] sm:$0xf] %v248
        %253 = vst [vmem:[#allocation3 + $0x14] sm:$0xf] %v249
        %v254 = vld [vmem:[%s180] sm:$0xff]
        %v255 = vld [vmem:[%s180 + $0x8] sm:$0xff]
        %258 = vrot.lane.b32.xlu0 %v254, 125
        %v259 = vpop.permute.xlu0 %258
        %260 = vrot.lane.b32.xlu0 %v255, 125
        %v261 = vpop.permute.xlu0 %260
        %v262 = vrot.slane %v259, 4
        %v263 = vrot.slane %v261, 4
        %vm264 = vcmask 1022976
        %v265 = vsel %vm264, %v259, %v262
        %v266 = vsel %vm264, %v261, %v263
        %269 = vst [vmem:[#allocation3 + $0x18] sm:$0xf] %v265
        %270 = vst [vmem:[#allocation3 + $0x1c] sm:$0xf] %v266
        %v271 = vld [vmem:[%s180] sm:$0xff]
        %v272 = vld [vmem:[%s180 + $0x8] sm:$0xff]
        %275 = vrot.lane.b32.xlu0 %v271, 124
        %v276 = vpop.permute.xlu0 %275
        %277 = vrot.lane.b32.xlu0 %v272, 124
        %v278 = vpop.permute.xlu0 %277
        %v279 = vrot.slane %v276, 4
        %v280 = vrot.slane %v278, 4
        %vm281 = vcmask 1014784
        %v282 = vsel %vm281, %v276, %v279
        %v283 = vsel %vm281, %v278, %v280
        %286 = vst [vmem:[#allocation3 + $0x20] sm:$0xf] %v282
        %287 = vst [vmem:[#allocation3 + $0x24] sm:$0xf] %v283
        %v288 = vld [vmem:[%s1] sm:$0xf]
        %v289 = vld [vmem:[#allocation3] sm:$0xf]
        %v290 = vld [vmem:[#allocation3 + $0x4] sm:$0xf]
        %v291 = vld [vmem:[#allocation3 + $0x8] sm:$0xf]
        %v292 = vld [vmem:[#allocation3 + $0xc] sm:$0xf]
        %v293 = vld [vmem:[#allocation3 + $0x10] sm:$0xf]
        %v294 = vld [vmem:[#allocation3 + $0x14] sm:$0xf]
        %v295 = vld [vmem:[#allocation3 + $0x18] sm:$0xf]
        %v296 = vld [vmem:[#allocation3 + $0x1c] sm:$0xf]
        %v297 = vld [vmem:[#allocation3 + $0x20] sm:$0xf]
        %v298 = vld [vmem:[#allocation3 + $0x24] sm:$0xf]
        %v299 = vld [vmem:[%s2] sm:$0xff]
        %301 = vset.pattern.permute.xlu0 0
        %302 = vperm.xlu0 %301, %v299
        %v303 = vpop.permute.xlu0 %302
        %v315 = vunpack.c.l.b16 %v289
        %v316 = vunpack.c.l.b16 %v290
        %v317 = vunpack.c.l.b16 %v291
        %v318 = vunpack.c.l.b16 %v292
        %v319 = vunpack.c.l.b16 %v293
        %v320 = vunpack.c.l.b16 %v294
        %v321 = vunpack.c.l.b16 %v295
        %v322 = vunpack.c.l.b16 %v296
        %v323 = vunpack.c.l.b16 %v297
        %v324 = vunpack.c.l.b16 %v298
        %v325 = vpack.c.b16 %v316, %v315
        %v326 = vpack.c.b16 %v318, %v317
        %v327 = vpack.c.b16 %v320, %v319
        %v328 = vpack.c.b16 %v322, %v321
        %v329 = vpack.c.b16 %v324, %v323
        %vm335 = vcmask 654336
        %v337 = vsel %vm335, %v288, 0
        %339 = vmatpush.bf16.msra.mxu0 0
        %340 = vmatpush.bf16.msra.mxu0 0
        %341 = vmatpush.bf16.msra.mxu0 0
        %342 = vmatpush.bf16.msra.mxu0 %v329
        %343 = vmatpush.bf16.msra.mxu0 %v328
        %344 = vmatpush.bf16.msra.mxu0 %v327
        %345 = vmatpush.bf16.msra.mxu0 %v326
        %346 = vmatpush.bf16.msra.mxu0 %v325
        %347 = vmatmul.bf16.gmra.mxu0 %v337
        %v348 = vpop.f32.mrf.mxu0
        %v349 = vadd.f32 %v303, %v348
        %v350 = vpop.f32.mrf.mxu0
        %351 = vdwg.mxu0
        %352 = vst [vmem:[%s136] sm:$0xff] %v349
        %s353 = sand.u32 %s81, 1
        %s354 = scalar_lea.sflag [#allocation6], %s353
        %s355 = sand.u32 %s81, 1
        %s356 = smul.addr %s355, 8
        %s357 = scalar_lea.vmem [#allocation5], %s356
        // Predicated region
        $region45: #{tpu_custom_call.1} parent=27 // pred_check
          %p358 = pneg %p91
        $region46: #{tpu_custom_call.1} parent=27 // pred_check_branch
          %360 = sbr.rel (%p358) target = $region48
        $region47: #{tpu_custom_call.1} parent=27 // pred_region
          %362 = vsyncadd %s354, 0
          %s363 = sadd.s32 %s22, %s21
          %s364 = smul.addr %s363, 8
          %s365 = scalar_lea.hbm %s3, %s364
          %s367 = sshll.u32 %s357, 4
          %s368 = int_to_ptr.vmem [resolvable:$true] %s367
          %s369 = sshll.u32 %s365, 4
          %s370 = int_to_ptr.hbm [resolvable:$true] %s369
          %372 = dma.vmem_to_hbm [thread:$0]  %s368, 128, %s370, %s354
        $region48: #{tpu_custom_call.1} parent=27 // pred_fallthru
          _
      $region28: #{tpu_custom_call.1} parent=5 // pred_fallthru
        _
      %p373 = scmp.le.s32.totalorder 2, %s12
      // Predicated region
      $region49: #{tpu_custom_call.1} parent=5 // pred_check
        %p374 = pneg %p373
      $region50: #{tpu_custom_call.1} parent=5 // pred_check_branch
        %376 = sbr.rel (%p374) target = $region52
      $region51: #{tpu_custom_call.1} parent=5 // pred_region
        %s377 = ssub.s32 %s12, 2
        // Predicated region
        $region53: #{tpu_custom_call.1} parent=51 // pred_check
          %p378 = pneg %p97
        $region54: #{tpu_custom_call.1} parent=51 // pred_check_branch
          %380 = sbr.rel (%p378) target = $region56
        $region55: #{tpu_custom_call.1} parent=51 // pred_region
          %s381 = sand.u32 %s82, 1
          %s382 = scalar_lea.sflag [#allocation6], %s381
          %s383 = sand.u32 %s82, 1
          %s384 = smul.addr %s383, 8
          %s385 = scalar_lea.vmem [#allocation5], %s384
          %387 = dma.done %s382, 128
        $region56: #{tpu_custom_call.1} parent=51 // pred_fallthru
          _
      $region52: #{tpu_custom_call.1} parent=5 // pred_fallthru
        _
    $region6: #{tpu_custom_call.1} parent=1 // loop_footer
      %s16 = sadd.s32 1, %s12
    $region7: #{tpu_custom_call.1} parent=1 // loop_footer_branch
      %11 = sbr.rel target = $region3
    $region8: #{tpu_custom_call.1} parent=1 // loop_exit
      _
    %388 = vsyncpa [#allocation6], 1
    %s389 = scalar_lea.sflag [#allocation6], 1
    %390 = vsyncpa %s389, 1
  %391 = vsyncmov [#allocation4]
  %s392 = vpop.sfrf %391
  %p393 = scmp.eq.s32.totalorder %s392, 0
  %p394 = pneg %p393
  %396 = shalt.err (%p394)
  %s397 = scalar_lea.sflag [#allocation4], 1
  %398 = vsyncmov %s397
  %s399 = vpop.sfrf %398
  %p400 = scmp.eq.s32.totalorder %s399, 0
  %p401 = pneg %p400
  %403 = shalt.err (%p401)

</llo_original>
